<compile_context>
chip_gen: v7x
topology: tpu7x:2x2x1
jax: 0.10.0
libtpu: 0.0.40
codegen_flags: <defaults>
</compile_context>

<pallas_src>
import jax
import jax.numpy as jnp
from jax.experimental import pallas as pl
from jax.experimental.pallas import tpu as pltpu


def _round_up(v, m):
    return (v + m - 1) // m * m


def _mil_logits_kernel(x_ref, w1_ref, b1_ref, w2_ref, out_ref):
    """One N-tile: Linear(L,D) -> tanh -> Linear(D,K), written as (K, TILE_N)."""
    # x: (TILE_N, L) f32 streamed, w1: (L, D) bf16, b1: (1, D) f32, w2: (D, K) f32
    xb = x_ref[...].astype(jnp.bfloat16)                               # in-kernel cast (VPU)
    h = jnp.dot(xb, w1_ref[...], preferred_element_type=jnp.float32)   # (TILE_N, D) f32
    h = jnp.tanh(h + b1_ref[...])                                      # EUP
    s = jnp.dot(h, w2_ref[...], preferred_element_type=jnp.float32)    # (TILE_N, K) f32
    # b2 (torch's second Linear bias) is intentionally omitted: a per-head
    # constant over the N axis cancels in the softmax over instances.
    out_ref[...] = jnp.transpose(s)                                    # (K, TILE_N), lane-dense


def _softmax_rows_kernel(s_ref, o_ref):
    """Softmax over axis=1 of a small (K, N) logits block (epilogue, tiny)."""
    s = s_ref[...]
    m = jnp.max(s, axis=1, keepdims=True)
    e = jnp.exp(s - m)
    denom = jnp.sum(e, axis=1, keepdims=True)
    o_ref[...] = e * pl.reciprocal(denom)   # exact reciprocal; epilogue is negligible


def mil_attention(x, w1, b1, w2, b2=None, *, tile_n=1024):
    """x: (N, L) -> attention weights (K, N), softmax-normalized over N."""
    N, L = x.shape
    L_w, D = w1.shape
    D_w, K = w2.shape
    assert L_w == L and D_w == D, (w1.shape, w2.shape)
    b1 = jnp.asarray(b1, jnp.float32).reshape(1, D)
    del b2  # cancels in the softmax over instances (see kernel comment)

    # Weights are tiny; cast once. x is NOT copied/padded -- streamed as-is.
    w1_bf = jnp.asarray(w1, jnp.bfloat16)
    w2_f = jnp.asarray(w2, jnp.float32)

    # N tile: lane-aligned (multiple of 128); the last (partial) tile is
    # handled by Pallas' masked edge DMAs, so no padding of N (or L) is needed.
    tile = min(_round_up(tile_n, 128), _round_up(N, 128))
    grid = (pl.cdiv(N, tile),)

    cost = pl.CostEstimate(
        flops=int(2 * N * L * D + 2 * N * D * K),
        transcendentals=int(N * D),
        bytes_accessed=int(N * L * 4 + L * D * 2 + D * 4 + D * K * 4 + K * N * 4),
    )

    # Pass 1: streamed logits, (K, N) with lane-dense (K, tile) output blocks.
    logits = pl.pallas_call(
        _mil_logits_kernel,
        out_shape=jax.ShapeDtypeStruct((K, N), jnp.float32),
        grid=grid,
        in_specs=[
            pl.BlockSpec((tile, L), lambda i: (i, 0)),   # stream x tiles (f32, no pre-pass)
            pl.BlockSpec((L, D), lambda i: (0, 0)),      # weights stay VMEM-resident
            pl.BlockSpec((1, D), lambda i: (0, 0)),
            pl.BlockSpec((D, K), lambda i: (0, 0)),
        ],
        out_specs=pl.BlockSpec((K, tile), lambda i: (0, i)),
        compiler_params=pltpu.CompilerParams(
            dimension_semantics=("parallel",),   # v7x: shard N tiles over both TCs
            vmem_limit_bytes=48 << 20,           # headroom under v7x's 64 MiB VMEM
        ),
        cost_estimate=cost,
    )(x, w1_bf, b1, w2_f)

    # Pass 2: softmax over the instance axis (full rows fit comfortably in VMEM).
    attn = pl.pallas_call(
        _softmax_rows_kernel,
        out_shape=jax.ShapeDtypeStruct((K, N), jnp.float32),
        in_specs=[pl.BlockSpec((K, N), lambda: (0, 0))],
        out_specs=pl.BlockSpec((K, N), lambda: (0, 0)),
    )(logits)
    return attn


def mil_attention_ref(x, w1, b1, w2, b2):
    """Pure-JAX reference matching the PyTorch forward (b2 included)."""
    h = jnp.tanh(x @ w1 + b1)
    s = h @ w2 + b2              # (N, K)
    return jax.nn.softmax(s.T, axis=1)


if __name__ == "__main__":
    # Small shapes consistent with the module (defaults are L=500, D=128, K=1).
    # N=300 / L=100 exercise both the ragged last N-tile and the non-128 L.
    N, L, D, K = 300, 100, 32, 2

    key = jax.random.PRNGKey(0)
    kx, kw1, kb1, kw2, kb2 = jax.random.split(key, 5)

    x = jax.random.normal(kx, (N, L), dtype=jnp.float32)
    # Kernel weight layout: already transposed vs torch (W1: (L,D), W2: (D,K)).
    w1 = jax.random.normal(kw1, (L, D), dtype=jnp.float32) * 0.1
    b1 = jax.random.normal(kb1, (D,), dtype=jnp.float32) * 0.1
    w2 = jax.random.normal(kw2, (D, K), dtype=jnp.float32) * 0.1
    b2 = jax.random.normal(kb2, (K,), dtype=jnp.float32) * 0.1

    # tile_n=128 -> 3-step grid with a partial last tile (exercises edge masking).
    out = mil_attention(x, w1, b1, w2, b2, tile_n=128)
    out = jax.block_until_ready(out)
    assert out.shape == (K, N), out.shape
    assert bool(jnp.all(jnp.isfinite(out)))

    # Reference with the same bf16 quantization of the streamed operands.
    x_bf = x.astype(jnp.bfloat16).astype(jnp.float32)
    w1_bf = w1.astype(jnp.bfloat16).astype(jnp.float32)
    ref_bf = mil_attention_ref(x_bf, w1_bf, b1, w2, b2)
    assert jnp.allclose(out, ref_bf, atol=2e-4, rtol=2e-4), float(
        jnp.max(jnp.abs(out - ref_bf))
    )

    # Sanity vs the full-f32 reference (loose: MXU inputs quantized to bf16).
    ref_f32 = mil_attention_ref(x, w1, b1, w2, b2)
    assert jnp.allclose(out, ref_f32, atol=2e-2, rtol=2e-2)

    # Each attention-head row sums to 1 over the N instances.
    assert jnp.allclose(jnp.sum(out, axis=1), jnp.ones((K,)), atol=1e-4)

    print("KERNEL_OK")
</pallas_src>

<mosaic_0001>
module attributes {stable_mosaic.version = 11 : i64} {
  func.func @_mil_logits_kernel(%arg0: i32, %arg1: memref<128x100xf32, #tpu.memory_space<vmem>>, %arg2: memref<100x32xbf16, #tpu.memory_space<vmem>>, %arg3: memref<1x32xf32, #tpu.memory_space<vmem>>, %arg4: memref<32x2xf32, #tpu.memory_space<vmem>>, %arg5: memref<2x128xf32, #tpu.memory_space<vmem>>) attributes {dimension_semantics = [#tpu.dimension_semantics<parallel>], iteration_bounds = array<i64: 3>, scalar_prefetch = 0 : i64, scratch_operands = 0 : i64, tpu.core_type = #tpu.core_type<tc>, window_params = [{transform_indices = @transform_0, window_bounds = array<i64: 128, 100>}, {pipeline_mode = #tpu.pipeline_mode<synchronous>, transform_indices = @transform_1, window_bounds = array<i64: 100, 32>}, {pipeline_mode = #tpu.pipeline_mode<synchronous>, transform_indices = @transform_2, window_bounds = array<i64: 1, 32>}, {pipeline_mode = #tpu.pipeline_mode<synchronous>, transform_indices = @transform_3, window_bounds = array<i64: 32, 2>}, {transform_indices = @transform_4, window_bounds = array<i64: 2, 128>}]} {
    %c0 = arith.constant 0 : index
    %c0_0 = arith.constant 0 : index
    %0 = vector.load %arg1[%c0, %c0_0] : memref<128x100xf32, #tpu.memory_space<vmem>>, vector<128x100xf32>
    %1 = arith.truncf %0 : vector<128x100xf32> to vector<128x100xbf16>
    %c0_1 = arith.constant 0 : index
    %c0_2 = arith.constant 0 : index
    %2 = vector.load %arg2[%c0_1, %c0_2] : memref<100x32xbf16, #tpu.memory_space<vmem>>, vector<100x32xbf16>
    %cst = arith.constant dense<0.000000e+00> : vector<128x32xf32>
    %3 = tpu.matmul %1, %2, %cst {dimension_numbers = #tpu.dot_dimension_numbers<[1], [0], [0], [1], [0, 0, 1, 1], [], []>} : vector<128x100xbf16>, vector<100x32xbf16>, vector<128x32xf32> -> vector<128x32xf32>
    %c0_3 = arith.constant 0 : index
    %c0_4 = arith.constant 0 : index
    %4 = vector.load %arg3[%c0_3, %c0_4] : memref<1x32xf32, #tpu.memory_space<vmem>>, vector<1x32xf32>
    %5 = vector.broadcast %4 : vector<1x32xf32> to vector<128x32xf32>
    %6 = arith.addf %3, %5 : vector<128x32xf32>
    %7 = math.tanh %6 : vector<128x32xf32>
    %c0_5 = arith.constant 0 : index
    %c0_6 = arith.constant 0 : index
    %8 = vector.load %arg4[%c0_5, %c0_6] : memref<32x2xf32, #tpu.memory_space<vmem>>, vector<32x2xf32>
    %cst_7 = arith.constant dense<0.000000e+00> : vector<128x2xf32>
    %9 = tpu.matmul %7, %8, %cst_7 {dimension_numbers = #tpu.dot_dimension_numbers<[1], [0], [0], [1], [0, 0, 1, 1], [], []>} : vector<128x32xf32>, vector<32x2xf32>, vector<128x2xf32> -> vector<128x2xf32>
    %10 = tpu.transpose %9, [1, 0] : vector<128x2xf32> -> vector<2x128xf32>
    %c0_8 = arith.constant 0 : index
    %c0_9 = arith.constant 0 : index
    %11 = vector.load %arg5[%c0_8, %c0_9] : memref<2x128xf32, #tpu.memory_space<vmem>>, vector<2x128xf32>
    tpu.vector_store %arg5[%c0_8, %c0_9], %10 {strides = array<i32>} : memref<2x128xf32, #tpu.memory_space<vmem>>, vector<2x128xf32>,
    return
  }
  func.func @transform_0(%arg0: i32) -> (i32, i32) {
    %c0_i32 = arith.constant 0 : i32
    %c0_i32_0 = arith.constant 0 : i32
    return %arg0, %c0_i32 : i32, i32
  }
  func.func @transform_1(%arg0: i32) -> (i32, i32) {
    %c0_i32 = arith.constant 0 : i32
    %c0_i32_0 = arith.constant 0 : i32
    %c0_i32_1 = arith.constant 0 : i32
    return %c0_i32, %c0_i32_0 : i32, i32
  }
  func.func @transform_2(%arg0: i32) -> (i32, i32) {
    %c0_i32 = arith.constant 0 : i32
    %c0_i32_0 = arith.constant 0 : i32
    %c0_i32_1 = arith.constant 0 : i32
    return %c0_i32, %c0_i32_0 : i32, i32
  }
  func.func @transform_3(%arg0: i32) -> (i32, i32) {
    %c0_i32 = arith.constant 0 : i32
    %c0_i32_0 = arith.constant 0 : i32
    %c0_i32_1 = arith.constant 0 : i32
    return %c0_i32, %c0_i32_0 : i32, i32
  }
  func.func @transform_4(%arg0: i32) -> (i32, i32) {
    %c0_i32 = arith.constant 0 : i32
    %c0_i32_0 = arith.constant 0 : i32
    return %c0_i32, %arg0 : i32, i32
  }
}

</mosaic_0001>

<llo_original>
// kernel: tpu_custom_call.1
$region0: #{tpu_custom_call.1}
  #allocation0 [shape = 'u32[]', space=smem, size = 0x4, offset = 0x4, fixed_abs, tag = 'smem constant byte address 0x4 - core index']
  #allocation1 [shape = 'u32[144,128]{1,0:T(1,128)}', space=vmem, size = 0x12000, scoped, tag = 'internal scratch']
  %s0 = inlined_call_operand.hbm [shape: f32[300,100], index: 0, kind: input, shape index: {}]
  %s1 = inlined_call_operand.vmem [shape: bf16[100,32], index: 1, kind: input, shape index: {}]
  %s2 = inlined_call_operand.vmem [shape: f32[1,32], index: 2, kind: input, shape index: {}]
  %s3 = inlined_call_operand.vmem [shape: f32[32,2], index: 3, kind: input, shape index: {}]
  %s4 = inlined_call_operand.hbm [shape: f32[2,300], index: 4, kind: output, shape index: {}]
  %s5 = sld [smem:[#allocation0]]
  $region53: #{tpu_custom_call.1} parent=0
    _
  %s7 = ssub.s32 1, %s5
  %s8 = scalar_select 0, %s7, %s5
  $region1: #{tpu_custom_call.1} parent=0
    #allocation2 [shape = 'u8[131072]{0}', space=vmem, size = 0x20000, scoped, tag = 'input window, operand 0']
    #allocation3 [shape = 's32[2]{0}', space=sflag, size = 0x8, scoped, tag = 'scoped memory for tpu_custom_call.1']
    #allocation4 [shape = 's32[2]{0}', space=sflag, size = 0x8, scoped, tag = 'scoped memory for tpu_custom_call.1']
    #allocation5 [shape = 'u8[2048]{0}', space=vmem, size = 0x800, scoped, tag = 'output window, operand 0']
    %9 = vsyncpa [#allocation3], 0
    %s10 = scalar_lea.sflag [#allocation3], 1
    %11 = vsyncpa %s10, 0
    %12 = vsyncpa [#allocation4], 0
    %s13 = scalar_lea.sflag [#allocation4], 1
    %14 = vsyncpa %s13, 0
    loop: start=0, step=1, limit=5
    $region2: #{tpu_custom_call.1} parent=1 // loop_pre_header
      _
    $region3: #{tpu_custom_call.1} parent=1 // loop_header
      %s16 = sphi 0, %s20
      %p17 = scmp.ge.s32.totalorder %s16, 5
      %s26 = sphi 0, %s28
      %s29 = sphi 0, %s26
      %s30 = sphi 0, %s29
      %s46 = sphi 0, %s30
      %s50 = sphi 0, %s50
      %s52 = sphi 0, %s50
      %s53 = sphi 0, %s52
      %s67 = sphi 0, %s53
      %s71 = sphi 0, %s71
      %s73 = sphi 0, %s71
      %s74 = sphi 0, %s73
      %s88 = sphi 0, %s74
      %s92 = sphi 0, %s92
      %s94 = sphi 0, %s92
      %s95 = sphi 0, %s94
      %s109 = sphi 0, %s95
      %s115 = sphi 0, %s117
      %s118 = sphi 0, %s115
      %s119 = sphi 0, %s118
      %s135 = sphi 0, %s119
    $region4: #{tpu_custom_call.1} parent=1 // loop_header_branch
      %19 = sbr.rel (%p17) target = $region8
    $region5: #{tpu_custom_call.1} parent=1 // loop_body
      %s21 = ssub.s32 %s16, 1
      %s22 = ssub.s32 %s16, 2
      %s23 = sadd.s32 %s16, 1
      %s24 = ssub.s32 %s16, %s23
      %p25 = scmp.eq.s32.totalorder %s24, 0
      %s27 = sadd.s32 %s26, 1
      %s28 = scalar_select %p25, %s26, %s27
      %p31 = pneg %p25
      %p32 = scmp.eq.s32.totalorder %s16, 2
      %p33 = por %p31, %p32
      %p34 = scmp.ne.s32.totalorder %s26, %s29
      %p35 = scmp.eq.s32.totalorder %s16, 0
      %p36 = por %p34, %p35
      %p37 = scmp.ne.s32.totalorder %s26, %s29
      %p38 = scmp.eq.s32.totalorder %s21, 2
      %p39 = por %p37, %p38
      %p40 = scmp.ne.s32.totalorder %s29, %s30
      %p41 = scmp.eq.s32.totalorder %s21, 0
      %p42 = por %p40, %p41
      %p43 = scmp.ne.s32.totalorder %s29, %s30
      %p44 = scmp.eq.s32.totalorder %s22, 2
      %p45 = por %p43, %p44
      %p47 = scmp.ne.s32.totalorder %s30, %s46
      %p48 = scmp.eq.s32.totalorder %s22, 0
      %p49 = por %p47, %p48
      %s51 = sadd.s32 %s50, 1
      %p54 = scmp.eq.s32.totalorder %s16, 2
      %p55 = scmp.ne.s32.totalorder %s50, %s52
      %p56 = scmp.eq.s32.totalorder %s16, 0
      %p57 = por %p55, %p56
      %p58 = scmp.ne.s32.totalorder %s50, %s52
      %p59 = scmp.eq.s32.totalorder %s21, 2
      %p60 = por %p58, %p59
      %p61 = scmp.ne.s32.totalorder %s52, %s53
      %p62 = scmp.eq.s32.totalorder %s21, 0
      %p63 = por %p61, %p62
      %p64 = scmp.ne.s32.totalorder %s52, %s53
      %p65 = scmp.eq.s32.totalorder %s22, 2
      %p66 = por %p64, %p65
      %p68 = scmp.ne.s32.totalorder %s53, %s67
      %p69 = scmp.eq.s32.totalorder %s22, 0
      %p70 = por %p68, %p69
      %s72 = sadd.s32 %s71, 1
      %p75 = scmp.eq.s32.totalorder %s16, 2
      %p76 = scmp.ne.s32.totalorder %s71, %s73
      %p77 = scmp.eq.s32.totalorder %s16, 0
      %p78 = por %p76, %p77
      %p79 = scmp.ne.s32.totalorder %s71, %s73
      %p80 = scmp.eq.s32.totalorder %s21, 2
      %p81 = por %p79, %p80
      %p82 = scmp.ne.s32.totalorder %s73, %s74
      %p83 = scmp.eq.s32.totalorder %s21, 0
      %p84 = por %p82, %p83
      %p85 = scmp.ne.s32.totalorder %s73, %s74
      %p86 = scmp.eq.s32.totalorder %s22, 2
      %p87 = por %p85, %p86
      %p89 = scmp.ne.s32.totalorder %s74, %s88
      %p90 = scmp.eq.s32.totalorder %s22, 0
      %p91 = por %p89, %p90
      %s93 = sadd.s32 %s92, 1
      %p96 = scmp.eq.s32.totalorder %s16, 2
      %p97 = scmp.ne.s32.totalorder %s92, %s94
      %p98 = scmp.eq.s32.totalorder %s16, 0
      %p99 = por %p97, %p98
      %p100 = scmp.ne.s32.totalorder %s92, %s94
      %p101 = scmp.eq.s32.totalorder %s21, 2
      %p102 = por %p100, %p101
      %p103 = scmp.ne.s32.totalorder %s94, %s95
      %p104 = scmp.eq.s32.totalorder %s21, 0
      %p105 = por %p103, %p104
      %p106 = scmp.ne.s32.totalorder %s94, %s95
      %p107 = scmp.eq.s32.totalorder %s22, 2
      %p108 = por %p106, %p107
      %p110 = scmp.ne.s32.totalorder %s95, %s109
      %p111 = scmp.eq.s32.totalorder %s22, 0
      %p112 = por %p110, %p111
      %s113 = ssub.s32 %s16, %s23
      %p114 = scmp.eq.s32.totalorder %s113, 0
      %s116 = sadd.s32 %s115, 1
      %s117 = scalar_select %p114, %s115, %s116
      %p120 = pneg %p114
      %p121 = scmp.eq.s32.totalorder %s16, 2
      %p122 = por %p120, %p121
      %p123 = scmp.ne.s32.totalorder %s115, %s118
      %p124 = scmp.eq.s32.totalorder %s16, 0
      %p125 = por %p123, %p124
      %p126 = scmp.ne.s32.totalorder %s115, %s118
      %p127 = scmp.eq.s32.totalorder %s21, 2
      %p128 = por %p126, %p127
      %p129 = scmp.ne.s32.totalorder %s118, %s119
      %p130 = scmp.eq.s32.totalorder %s21, 0
      %p131 = por %p129, %p130
      %p132 = scmp.ne.s32.totalorder %s118, %s119
      %p133 = scmp.eq.s32.totalorder %s22, 2
      %p134 = por %p132, %p133
      %p136 = scmp.ne.s32.totalorder %s119, %s135
      %p137 = scmp.eq.s32.totalorder %s22, 0
      %p138 = por %p136, %p137
      %p139 = scmp.le.s32.totalorder 1, %s16
      %p140 = scmp.lt.s32.totalorder %s16, 4
      %p141 = pnand %p139, %p140
      %p142 = pneg %p141
      // Predicated region
      $region9: #{tpu_custom_call.1} parent=5 // pred_check
        _
      $region10: #{tpu_custom_call.1} parent=5 // pred_check_branch
        %144 = sbr.rel (%p141) target = $region12
      $region11: #{tpu_custom_call.1} parent=5 // pred_region
        %s145 = ssub.s32 %s16, 1
        // Predicated region
        $region13: #{tpu_custom_call.1} parent=11 // pred_check
          %p146 = pneg %p63
        $region14: #{tpu_custom_call.1} parent=11 // pred_check_branch
          %148 = sbr.rel (%p146) target = $region16
        $region15: #{tpu_custom_call.1} parent=11 // pred_region
          _
        $region16: #{tpu_custom_call.1} parent=11 // pred_fallthru
          _
        // Predicated region
        $region17: #{tpu_custom_call.1} parent=11 // pred_check
          %p149 = pneg %p84
        $region18: #{tpu_custom_call.1} parent=11 // pred_check_branch
          %151 = sbr.rel (%p149) target = $region20
        $region19: #{tpu_custom_call.1} parent=11 // pred_region
          _
        $region20: #{tpu_custom_call.1} parent=11 // pred_fallthru
          _
        // Predicated region
        $region21: #{tpu_custom_call.1} parent=11 // pred_check
          %p152 = pneg %p105
        $region22: #{tpu_custom_call.1} parent=11 // pred_check_branch
          %154 = sbr.rel (%p152) target = $region24
        $region23: #{tpu_custom_call.1} parent=11 // pred_region
          _
        $region24: #{tpu_custom_call.1} parent=11 // pred_fallthru
          _
      $region12: #{tpu_custom_call.1} parent=5 // pred_fallthru
        _
      %p155 = scmp.lt.s32.totalorder %s16, 3
      // Predicated region
      $region25: #{tpu_custom_call.1} parent=5 // pred_check
        %p156 = pneg %p155
      $region26: #{tpu_custom_call.1} parent=5 // pred_check_branch
        %158 = sbr.rel (%p156) target = $region28
      $region27: #{tpu_custom_call.1} parent=5 // pred_region
        // Predicated region
        $region29: #{tpu_custom_call.1} parent=27 // pred_check
          %p159 = pneg %p36
        $region30: #{tpu_custom_call.1} parent=27 // pred_check_branch
          %161 = sbr.rel (%p159) target = $region32
        $region31: #{tpu_custom_call.1} parent=27 // pred_region
          %s162 = sand.u32 %s26, 1
          %s163 = scalar_lea.sflag [#allocation3], %s162
          %s164 = sand.u32 %s26, 1
          %s165 = smul.addr %s164, 128
          %s166 = scalar_lea.vmem [#allocation2], %s165
          %s167 = smul.u32 16, %s16
          %s168 = ssub.s32 38, %s167
          %p169 = scmp.lt.s32.totalorder %s168, 16
          %s170 = scalar_select %p169, %s168, 16
          %s171 = smul.u32 128, %s170
          %s173 = ssub.s32 2048, %s171
          %174 = vsyncadd %s163, %s173
          %p175 = scmp.ne.s32.totalorder 0, %s171
          %s176 = smul.addr %s167, 128
          %s177 = scalar_lea.hbm %s0, %s176
          %s178 = smul.u32 8, %s170
          %s179 = sshll.u32 %s166, 4
          %s180 = int_to_ptr.vmem [resolvable:$true] %s179
          %s181 = sshll.u32 %s178, 4
          %185 = dma.hbm_to_vmem [thread:$0]  (%p175), %s177, %s181, %s180, %s163, 128, 128, 8
        $region32: #{tpu_custom_call.1} parent=27 // pred_fallthru
          _
      $region28: #{tpu_custom_call.1} parent=5 // pred_fallthru
        _
      %p186 = scmp.le.s32.totalorder 1, %s16
      %p187 = scmp.lt.s32.totalorder %s16, 4
      %p188 = pnand %p186, %p187
      %p189 = pneg %p188
      // Predicated region
      $region33: #{tpu_custom_call.1} parent=5 // pred_check
        _
      $region34: #{tpu_custom_call.1} parent=5 // pred_check_branch
        %191 = sbr.rel (%p188) target = $region36
      $region35: #{tpu_custom_call.1} parent=5 // pred_region
        %s192 = ssub.s32 %s16, 1
        %s193 = sand.u32 %s29, 1
        %s194 = scalar_lea.sflag [#allocation3], %s193
        %s195 = sand.u32 %s29, 1
        %s196 = smul.addr %s195, 128
        %s197 = scalar_lea.vmem [#allocation2], %s196
        // Predicated region
        $region37: #{tpu_custom_call.1} parent=35 // pred_check
          %p198 = pneg %p42
        $region38: #{tpu_custom_call.1} parent=35 // pred_check_branch
          %200 = sbr.rel (%p198) target = $region40
        $region39: #{tpu_custom_call.1} parent=35 // pred_region
          %201 = dma.done %s194, 2048
        $region40: #{tpu_custom_call.1} parent=35 // pred_fallthru
          _
        %s202 = sand.u32 %s29, 1
        %s203 = scalar_lea.sflag [#allocation3], %s202
        %s204 = sand.u32 %s29, 1
        %s205 = smul.addr %s204, 128
        %s206 = scalar_lea.vmem [#allocation2], %s205
        %p207 = pneg %p42
        %p208 = pneg %p39
        %p209 = pneg %p63
        %p210 = pneg %p60
        %p211 = pneg %p84
        %p212 = pneg %p81
        %p213 = pneg %p105
        %p214 = pneg %p102
        %p215 = pneg %p131
        %p216 = pneg %p128
        %s217 = sand.u32 %s118, 1
        %s218 = scalar_lea.sflag [#allocation4], %s217
        %s219 = sand.u32 %s118, 1
        %s220 = smul.addr %s219, 2
        %s221 = scalar_lea.vmem [#allocation5], %s220
        %s222 = smul.u32 16, %s21
        %s223 = ssub.s32 38, %s222
        %p224 = scmp.lt.s32.totalorder %s223, 16
        %s225 = scalar_select %p224, %s223, 16
        %s226 = smul.u32 128, %s225
        %v228 = vld [vmem:[%s197] sm:$0xff]
        %v229 = vld [vmem:[%s197 + $0x8] sm:$0xff]
        %v230 = vld [vmem:[%s197 + $0x10] sm:$0xff]
        %v231 = vld [vmem:[%s197 + $0x18] sm:$0xff]
        %v232 = vld [vmem:[%s197 + $0x20] sm:$0xff]
        %v233 = vld [vmem:[%s197 + $0x28] sm:$0xff]
        %v234 = vld [vmem:[%s197 + $0x30] sm:$0xff]
        %v235 = vld [vmem:[%s197 + $0x38] sm:$0xff]
        %v236 = vld [vmem:[%s197 + $0x40] sm:$0xff]
        %v237 = vld [vmem:[%s197 + $0x48] sm:$0xff]
        %v238 = vld [vmem:[%s197 + $0x50] sm:$0xff]
        %v239 = vld [vmem:[%s197 + $0x58] sm:$0xff]
        %v240 = vld [vmem:[%s197 + $0x60] sm:$0xff]
        %v241 = vld [vmem:[%s197 + $0x68] sm:$0xff]
        %v242 = vld [vmem:[%s197 + $0x70] sm:$0xff]
        %v243 = vld [vmem:[%s197 + $0x78] sm:$0xff]
        %v244 = vpack.c.bf16 %v229, %v228
        %v245 = vpack.c.bf16 %v231, %v230
        %v246 = vpack.c.bf16 %v233, %v232
        %v247 = vpack.c.bf16 %v235, %v234
        %v248 = vpack.c.bf16 %v237, %v236
        %v249 = vpack.c.bf16 %v239, %v238
        %v250 = vpack.c.bf16 %v241, %v240
        %v251 = vpack.c.bf16 %v243, %v242
        %v252 = vld [vmem:[%s1] sm:$0xf]
        %v253 = vld [vmem:[%s1 + $0x4] sm:$0xf]
        %v254 = vld [vmem:[%s1 + $0x8] sm:$0xf]
        %v255 = vld [vmem:[%s1 + $0xc] sm:$0xf]
        %v256 = vld [vmem:[%s1 + $0x10] sm:$0xf]
        %v257 = vld [vmem:[%s1 + $0x14] sm:$0xf]
        %v258 = vld [vmem:[%s1 + $0x18] sm:$0xf]
        %v259 = vld [vmem:[%s1 + $0x1c] sm:$0xf]
        %v260 = vld [vmem:[%s1 + $0x20] sm:$0xf]
        %v261 = vld [vmem:[%s1 + $0x24] sm:$0xf]
        %v262 = vld [vmem:[%s1 + $0x28] sm:$0xf]
        %v263 = vld [vmem:[%s1 + $0x2c] sm:$0xf]
        %v264 = vld [vmem:[%s1 + $0x30] sm:$0x3]
        %v265 = vld [vmem:[%s2] sm:$0x1]
        %v267 = vlaneseq
        %v268 = vshrl.u32 %v267, 7
        %v269 = vsub.s32 0, %v268
        %v270 = vrot.slane %v265, %v269
        %v285 = vunpack.c.l.b16 %v252
        %v286 = vunpack.c.l.b16 %v253
        %v287 = vunpack.c.l.b16 %v254
        %v288 = vunpack.c.l.b16 %v255
        %v289 = vunpack.c.l.b16 %v256
        %v290 = vunpack.c.l.b16 %v257
        %v291 = vunpack.c.l.b16 %v258
        %v292 = vunpack.c.l.b16 %v259
        %v293 = vunpack.c.l.b16 %v260
        %v294 = vunpack.c.l.b16 %v261
        %v295 = vunpack.c.l.b16 %v262
        %v296 = vunpack.c.l.b16 %v263
        %v297 = vunpack.c.l.b16 %v264
        %v298 = vpack.c.b16 %v286, %v285
        %v299 = vpack.c.b16 %v288, %v287
        %v300 = vpack.c.b16 %v290, %v289
        %v301 = vpack.c.b16 %v292, %v291
        %v302 = vpack.c.b16 %v294, %v293
        %v303 = vpack.c.b16 %v296, %v295
        %v304 = vpack.c.b16 %v297, %v297
        %vm311 = vcmask 818176
        %v313 = vsel %vm311, %v244, 0
        %v316 = vsel %vm311, %v245, 0
        %v319 = vsel %vm311, %v246, 0
        %v322 = vsel %vm311, %v247, 0
        %v325 = vsel %vm311, %v248, 0
        %v328 = vsel %vm311, %v249, 0
        %v331 = vsel %vm311, %v250, 0
        %v334 = vsel %vm311, %v251, 0
        %vm336 = vcmask 1041408
        %v338 = vsel %vm336, %v304, 0
        %340 = vmatprep.subr.bf16.mxu0 0
        %341 = vmatpush1.bf16.msra.mxu0 %v298
        %342 = vmatprep.subr.bf16.mxu0 0
        %343 = vmatpush1.bf16.msra.mxu0 %v299
        %344 = vmatprep.subr.bf16.mxu0 0
        %345 = vmatpush1.bf16.msra.mxu0 %v300
        %346 = vmatprep.subr.bf16.mxu0 0
        %347 = vmatpush1.bf16.msra.mxu0 %v301
        %348 = vmatprep.subr.bf16.mxu0 0
        %349 = vmatpush1.bf16.msra.mxu0 %v302
        %350 = vmatprep.subr.bf16.mxu0 0
        %351 = vmatpush1.bf16.msra.mxu0 %v303
        %352 = vmatprep.subr.bf16.mxu0 0
        %353 = vmatpush1.bf16.msra.mxu0 %v338
        %354 = vmatprep.subr.bf16.mxu0 0
        %355 = vmatpush1.bf16.msra.mxu0 0
        %356 = vmatprep.subr.bf16.mxu0 0
        %357 = vmatpush1.bf16.msra.mxu0 0
        %358 = vmatprep.subr.bf16.mxu0 0
        %359 = vmatpush1.bf16.msra.mxu0 0
        %360 = vmatprep.subr.bf16.mxu0 0
        %361 = vmatpush1.bf16.msra.mxu0 0
        %362 = vmatprep.subr.bf16.mxu0 0
        %363 = vmatpush1.bf16.msra.mxu0 0
        %364 = vmatprep.subr.bf16.mxu0 0
        %365 = vmatpush1.bf16.msra.mxu0 0
        %366 = vmatprep.subr.bf16.mxu0 0
        %367 = vmatpush1.bf16.msra.mxu0 0
        %368 = vmatprep.subr.bf16.mxu0 0
        %369 = vmatpush1.bf16.msra.mxu0 0
        %370 = vmatprep.subr.bf16.mxu0 0
        %371 = vmatpush1.bf16.msra.mxu0 0
        %372 = vmatprep.mubr.bf16.mxu0 0
        %373 = vmatmul.mubr.bf16.gmra.mrb[0].mxu0 %v313
        %v374 = vpop.f32.mrb[0].mxu0
        %v375 = vadd.f32 %v270, %v374
        %v376 = vpop.f32.mrb[0].mxu0
        %v377 = vpop.f32.mrb[0].mxu0
        %v378 = vadd.f32 %v270, %v377
        %v379 = vpop.f32.mrb[0].mxu0
        %380 = vmatprep.mubr.bf16.mxu0 0
        %381 = vmatmul.mubr.bf16.gmra.mrb[0].mxu0 %v316
        %v382 = vpop.f32.mrb[0].mxu0
        %v383 = vadd.f32 %v270, %v382
        %v384 = vpop.f32.mrb[0].mxu0
        %v385 = vpop.f32.mrb[0].mxu0
        %v386 = vadd.f32 %v270, %v385
        %v387 = vpop.f32.mrb[0].mxu0
        %388 = vmatprep.mubr.bf16.mxu0 0
        %389 = vmatmul.mubr.bf16.gmra.mrb[0].mxu0 %v319
        %v390 = vpop.f32.mrb[0].mxu0
        %v391 = vadd.f32 %v270, %v390
        %v392 = vpop.f32.mrb[0].mxu0
        %v393 = vpop.f32.mrb[0].mxu0
        %v394 = vadd.f32 %v270, %v393
        %v395 = vpop.f32.mrb[0].mxu0
        %396 = vmatprep.mubr.bf16.mxu0 0
        %397 = vmatmul.mubr.bf16.gmra.mrb[0].mxu0 %v322
        %v398 = vpop.f32.mrb[0].mxu0
        %v399 = vadd.f32 %v270, %v398
        %v400 = vpop.f32.mrb[0].mxu0
        %v401 = vpop.f32.mrb[0].mxu0
        %v402 = vadd.f32 %v270, %v401
        %v403 = vpop.f32.mrb[0].mxu0
        %404 = vmatprep.mubr.bf16.mxu0 0
        %405 = vmatmul.mubr.bf16.gmra.mrb[0].mxu0 %v325
        %v406 = vpop.f32.mrb[0].mxu0
        %v407 = vadd.f32 %v270, %v406
        %v408 = vpop.f32.mrb[0].mxu0
        %v409 = vpop.f32.mrb[0].mxu0
        %v410 = vadd.f32 %v270, %v409
        %v411 = vpop.f32.mrb[0].mxu0
        %412 = vmatprep.mubr.bf16.mxu0 0
        %413 = vmatmul.mubr.bf16.gmra.mrb[0].mxu0 %v328
        %v414 = vpop.f32.mrb[0].mxu0
        %v415 = vadd.f32 %v270, %v414
        %v416 = vpop.f32.mrb[0].mxu0
        %v417 = vpop.f32.mrb[0].mxu0
        %v418 = vadd.f32 %v270, %v417
        %v419 = vpop.f32.mrb[0].mxu0
        %420 = vmatprep.mubr.bf16.mxu0 0
        %421 = vmatmul.mubr.bf16.gmra.mrb[0].mxu0 %v331
        %v422 = vpop.f32.mrb[0].mxu0
        %v423 = vadd.f32 %v270, %v422
        %v424 = vpop.f32.mrb[0].mxu0
        %v425 = vpop.f32.mrb[0].mxu0
        %v426 = vadd.f32 %v270, %v425
        %v427 = vpop.f32.mrb[0].mxu0
        %428 = vmatprep.mubr.bf16.mxu0 0
        %429 = vmatmul.mubr.bf16.gmra.mrb[0].mxu0 %v334
        %v430 = vpop.f32.mrb[0].mxu0
        %v431 = vadd.f32 %v270, %v430
        %v432 = vpop.f32.mrb[0].mxu0
        %v433 = vpop.f32.mrb[0].mxu0
        %v434 = vadd.f32 %v270, %v433
        %v435 = vpop.f32.mrb[0].mxu0
        %436 = vdwg.mxu0
        %v437 = vtanh.pop %v375
        %v438 = vtanh.pop %v378
        %v439 = vtanh.pop %v383
        %v440 = vtanh.pop %v386
        %v441 = vtanh.pop %v391
        %v442 = vtanh.pop %v394
        %v443 = vtanh.pop %v399
        %v444 = vtanh.pop %v402
        %v445 = vtanh.pop %v407
        %v446 = vtanh.pop %v410
        %v447 = vtanh.pop %v415
        %v448 = vtanh.pop %v418
        %v449 = vtanh.pop %v423
        %v450 = vtanh.pop %v426
        %v451 = vtanh.pop %v431
        %v452 = vtanh.pop %v434
        %v453 = vld [vmem:[%s3] sm:$0xff]
        %v454 = vld [vmem:[%s3 + $0x8] sm:$0xff]
        %v455 = vld [vmem:[%s3 + $0x10] sm:$0xff]
        %v456 = vld [vmem:[%s3 + $0x18] sm:$0xff]
        %vm457 = vcmask 261120
        %v459 = vsel %vm457, %v437, 0
        %v462 = vsel %vm457, %v438, 0
        %v465 = vsel %vm457, %v439, 0
        %v468 = vsel %vm457, %v440, 0
        %v471 = vsel %vm457, %v441, 0
        %v474 = vsel %vm457, %v442, 0
        %v477 = vsel %vm457, %v443, 0
        %v480 = vsel %vm457, %v444, 0
        %v483 = vsel %vm457, %v445, 0
        %v486 = vsel %vm457, %v446, 0
        %v489 = vsel %vm457, %v447, 0
        %v492 = vsel %vm457, %v448, 0
        %v495 = vsel %vm457, %v449, 0
        %v498 = vsel %vm457, %v450, 0
        %v501 = vsel %vm457, %v451, 0
        %v504 = vsel %vm457, %v452, 0
        %506 = vmatprep.subr.mxu0 0.0
        %507 = vmatpush1.msra.mxu0 %v453
        %508 = vmatprep.subr.mxu0 0.0
        %509 = vmatpush1.msra.mxu0 %v454
        %510 = vmatprep.subr.mxu0 0.0
        %511 = vmatpush1.msra.mxu0 %v455
        %512 = vmatprep.subr.mxu0 0.0
        %513 = vmatpush1.msra.mxu0 %v456
        %514 = vmatprep.subr.mxu0 0.0
        %515 = vmatpush1.msra.mxu0 0.0
        %516 = vmatprep.subr.mxu0 0.0
        %517 = vmatpush1.msra.mxu0 0.0
        %518 = vmatprep.subr.mxu0 0.0
        %519 = vmatpush1.msra.mxu0 0.0
        %520 = vmatprep.subr.mxu0 0.0
        %521 = vmatpush1.msra.mxu0 0.0
        %522 = vmatprep.subr.mxu0 0.0
        %523 = vmatpush1.msra.mxu0 0.0
        %524 = vmatprep.subr.mxu0 0.0
        %525 = vmatpush1.msra.mxu0 0.0
        %526 = vmatprep.subr.mxu0 0.0
        %527 = vmatpush1.msra.mxu0 0.0
        %528 = vmatprep.subr.mxu0 0.0
        %529 = vmatpush1.msra.mxu0 0.0
        %530 = vmatprep.subr.mxu0 0.0
        %531 = vmatpush1.msra.mxu0 0.0
        %532 = vmatprep.subr.mxu0 0.0
        %533 = vmatpush1.msra.mxu0 0.0
        %534 = vmatprep.subr.mxu0 0.0
        %535 = vmatpush1.msra.mxu0 0.0
        %536 = vmatprep.subr.mxu0 0.0
        %537 = vmatpush1.msra.mxu0 0.0
        %538 = vmatprep.subr.mxu0 0.0
        %539 = vmatpush1.msra.mxu0 0.0
        %540 = vmatprep.subr.mxu0 0.0
        %541 = vmatpush1.msra.mxu0 0.0
        %542 = vmatprep.subr.mxu0 0.0
        %543 = vmatpush1.msra.mxu0 0.0
        %544 = vmatprep.subr.mxu0 0.0
        %545 = vmatpush1.msra.mxu0 0.0
        %546 = vmatprep.subr.mxu0 0.0
        %547 = vmatpush1.msra.mxu0 0.0
        %548 = vmatprep.subr.mxu0 0.0
        %549 = vmatpush1.msra.mxu0 0.0
        %550 = vmatprep.subr.mxu0 0.0
        %551 = vmatpush1.msra.mxu0 0.0
        %552 = vmatprep.subr.mxu0 0.0
        %553 = vmatpush1.msra.mxu0 0.0
        %554 = vmatprep.subr.mxu0 0.0
        %555 = vmatpush1.msra.mxu0 0.0
        %556 = vmatprep.subr.mxu0 0.0
        %557 = vmatpush1.msra.mxu0 0.0
        %558 = vmatprep.subr.mxu0 0.0
        %559 = vmatpush1.msra.mxu0 0.0
        %560 = vmatprep.subr.mxu0 0.0
        %561 = vmatpush1.msra.mxu0 0.0
        %562 = vmatprep.subr.mxu0 0.0
        %563 = vmatpush1.msra.mxu0 0.0
        %564 = vmatprep.subr.mxu0 0.0
        %565 = vmatpush1.msra.mxu0 0.0
        %566 = vmatprep.subr.mxu0 0.0
        %567 = vmatpush1.msra.mxu0 0.0
        %568 = vmatprep.subr.mxu0 0.0
        %569 = vmatpush1.msra.mxu0 0.0
        %570 = vmatprep.mubr.f32.mxu0 0.0
        %571 = vmatmul.mubr.f32.gmra.mrb[0].mxu0 %v459
        %v572 = vpop.f32.mrb[0].mxu0
        %v573 = vadd.f32 0.0, %v572
        %v574 = vpop.f32.mrb[0].mxu0
        %575 = vmatprep.mubr.f32.mxu0 0.0
        %576 = vmatmul.mubr.f32.gmra.mrb[0].mxu0 %v462
        %v577 = vpop.f32.mrb[0].mxu0
        %v578 = vadd.f32 0.0, %v577
        %v579 = vpop.f32.mrb[0].mxu0
        %580 = vmatprep.mubr.f32.mxu0 0.0
        %581 = vmatmul.mubr.f32.gmra.mrb[0].mxu0 %v465
        %v582 = vpop.f32.mrb[0].mxu0
        %v583 = vadd.f32 0.0, %v582
        %v584 = vpop.f32.mrb[0].mxu0
        %585 = vmatprep.mubr.f32.mxu0 0.0
        %586 = vmatmul.mubr.f32.gmra.mrb[0].mxu0 %v468
        %v587 = vpop.f32.mrb[0].mxu0
        %v588 = vadd.f32 0.0, %v587
        %v589 = vpop.f32.mrb[0].mxu0
        %590 = vmatprep.mubr.f32.mxu0 0.0
        %591 = vmatmul.mubr.f32.gmra.mrb[0].mxu0 %v471
        %v592 = vpop.f32.mrb[0].mxu0
        %v593 = vadd.f32 0.0, %v592
        %v594 = vpop.f32.mrb[0].mxu0
        %595 = vmatprep.mubr.f32.mxu0 0.0
        %596 = vmatmul.mubr.f32.gmra.mrb[0].mxu0 %v474
        %v597 = vpop.f32.mrb[0].mxu0
        %v598 = vadd.f32 0.0, %v597
        %v599 = vpop.f32.mrb[0].mxu0
        %600 = vmatprep.mubr.f32.mxu0 0.0
        %601 = vmatmul.mubr.f32.gmra.mrb[0].mxu0 %v477
        %v602 = vpop.f32.mrb[0].mxu0
        %v603 = vadd.f32 0.0, %v602
        %v604 = vpop.f32.mrb[0].mxu0
        %605 = vmatprep.mubr.f32.mxu0 0.0
        %606 = vmatmul.mubr.f32.gmra.mrb[0].mxu0 %v480
        %v607 = vpop.f32.mrb[0].mxu0
        %v608 = vadd.f32 0.0, %v607
        %v609 = vpop.f32.mrb[0].mxu0
        %610 = vmatprep.mubr.f32.mxu0 0.0
        %611 = vmatmul.mubr.f32.gmra.mrb[0].mxu0 %v483
        %v612 = vpop.f32.mrb[0].mxu0
        %v613 = vadd.f32 0.0, %v612
        %v614 = vpop.f32.mrb[0].mxu0
        %615 = vmatprep.mubr.f32.mxu0 0.0
        %616 = vmatmul.mubr.f32.gmra.mrb[0].mxu0 %v486
        %v617 = vpop.f32.mrb[0].mxu0
        %v618 = vadd.f32 0.0, %v617
        %v619 = vpop.f32.mrb[0].mxu0
        %620 = vmatprep.mubr.f32.mxu0 0.0
        %621 = vmatmul.mubr.f32.gmra.mrb[0].mxu0 %v489
        %v622 = vpop.f32.mrb[0].mxu0
        %v623 = vadd.f32 0.0, %v622
        %v624 = vpop.f32.mrb[0].mxu0
        %625 = vmatprep.mubr.f32.mxu0 0.0
        %626 = vmatmul.mubr.f32.gmra.mrb[0].mxu0 %v492
        %v627 = vpop.f32.mrb[0].mxu0
        %v628 = vadd.f32 0.0, %v627
        %v629 = vpop.f32.mrb[0].mxu0
        %630 = vmatprep.mubr.f32.mxu0 0.0
        %631 = vmatmul.mubr.f32.gmra.mrb[0].mxu0 %v495
        %v632 = vpop.f32.mrb[0].mxu0
        %v633 = vadd.f32 0.0, %v632
        %v634 = vpop.f32.mrb[0].mxu0
        %635 = vmatprep.mubr.f32.mxu0 0.0
        %636 = vmatmul.mubr.f32.gmra.mrb[0].mxu0 %v498
        %v637 = vpop.f32.mrb[0].mxu0
        %v638 = vadd.f32 0.0, %v637
        %v639 = vpop.f32.mrb[0].mxu0
        %640 = vmatprep.mubr.f32.mxu0 0.0
        %641 = vmatmul.mubr.f32.gmra.mrb[0].mxu0 %v501
        %v642 = vpop.f32.mrb[0].mxu0
        %v643 = vadd.f32 0.0, %v642
        %v644 = vpop.f32.mrb[0].mxu0
        %645 = vmatprep.mubr.f32.mxu0 0.0
        %646 = vmatmul.mubr.f32.gmra.mrb[0].mxu0 %v504
        %v647 = vpop.f32.mrb[0].mxu0
        %v648 = vadd.f32 0.0, %v647
        %v649 = vpop.f32.mrb[0].mxu0
        %650 = vdwg.mxu0
        %651 = vxpose.xlu0.b32.start [1/16] %v573, 128
        %652 = vxpose.xlu0.b32.cont [2/16] %v578, 128
        %653 = vxpose.xlu0.b32.cont [3/16] %v583, 128
        %654 = vxpose.xlu0.b32.cont [4/16] %v588, 128
        %655 = vxpose.xlu0.b32.cont [5/16] %v593, 128
        %656 = vxpose.xlu0.b32.cont [6/16] %v598, 128
        %657 = vxpose.xlu0.b32.cont [7/16] %v603, 128
        %658 = vxpose.xlu0.b32.cont [8/16] %v608, 128
        %659 = vxpose.xlu0.b32.cont [9/16] %v613, 128
        %660 = vxpose.xlu0.b32.cont [10/16] %v618, 128
        %661 = vxpose.xlu0.b32.cont [11/16] %v623, 128
        %662 = vxpose.xlu0.b32.cont [12/16] %v628, 128
        %663 = vxpose.xlu0.b32.cont [13/16] %v633, 128
        %664 = vxpose.xlu0.b32.cont [14/16] %v638, 128
        %665 = vxpose.xlu0.b32.cont [15/16] %v643, 128
        %666 = vxpose.xlu0.b32.end [16/16] %v648, 128
        %v667 = vpop.trf.xlu0
        %v668 = vpop.trf.xlu0
        %v669 = vpop.trf.xlu0
        %v670 = vpop.trf.xlu0
        %v671 = vpop.trf.xlu0
        %v672 = vpop.trf.xlu0
        %v673 = vpop.trf.xlu0
        %v674 = vpop.trf.xlu0
        %v675 = vpop.trf.xlu0
        %v676 = vpop.trf.xlu0
        %v677 = vpop.trf.xlu0
        %v678 = vpop.trf.xlu0
        %v679 = vpop.trf.xlu0
        %v680 = vpop.trf.xlu0
        %v681 = vpop.trf.xlu0
        %v682 = vpop.trf.xlu0
        %683 = vst [vmem:[%s221] sm:$0x3] %v667
        %s684 = sand.u32 %s118, 1
        %s685 = scalar_lea.sflag [#allocation4], %s684
        %s686 = sand.u32 %s118, 1
        %s687 = smul.addr %s686, 2
        %s688 = scalar_lea.vmem [#allocation5], %s687
        // Predicated region
        $region41: #{tpu_custom_call.1} parent=35 // pred_check
          %p689 = pneg %p128
        $region42: #{tpu_custom_call.1} parent=35 // pred_check_branch
          %691 = sbr.rel (%p689) target = $region44
        $region43: #{tpu_custom_call.1} parent=35 // pred_region
          %s693 = ssub.s32 32, 32
          %694 = vsyncadd %s685, %s693
          %s695 = smul.addr %s21, 32
          %s696 = scalar_lea.hbm %s4, %s695
          %s698 = sshll.u32 %s688, 4
          %s699 = int_to_ptr.vmem [resolvable:$true] %s698
          %701 = dma.vmem_to_hbm [thread:$0]  %s699, 32, %s696, %s685
        $region44: #{tpu_custom_call.1} parent=35 // pred_fallthru
          _
      $region36: #{tpu_custom_call.1} parent=5 // pred_fallthru
        _
      %p702 = scmp.le.s32.totalorder 2, %s16
      // Predicated region
      $region45: #{tpu_custom_call.1} parent=5 // pred_check
        %p703 = pneg %p702
      $region46: #{tpu_custom_call.1} parent=5 // pred_check_branch
        %705 = sbr.rel (%p703) target = $region48
      $region47: #{tpu_custom_call.1} parent=5 // pred_region
        %s706 = ssub.s32 %s16, 2
        // Predicated region
        $region49: #{tpu_custom_call.1} parent=47 // pred_check
          %p707 = pneg %p134
        $region50: #{tpu_custom_call.1} parent=47 // pred_check_branch
          %709 = sbr.rel (%p707) target = $region52
        $region51: #{tpu_custom_call.1} parent=47 // pred_region
          %s710 = sand.u32 %s119, 1
          %s711 = scalar_lea.sflag [#allocation4], %s710
          %s712 = sand.u32 %s119, 1
          %s713 = smul.addr %s712, 2
          %s714 = scalar_lea.vmem [#allocation5], %s713
          %715 = dma.done %s711, 32
        $region52: #{tpu_custom_call.1} parent=47 // pred_fallthru
          _
      $region48: #{tpu_custom_call.1} parent=5 // pred_fallthru
        _
    $region6: #{tpu_custom_call.1} parent=1 // loop_footer
      %s20 = sadd.s32 1, %s16
    $region7: #{tpu_custom_call.1} parent=1 // loop_footer_branch
      %15 = sbr.rel target = $region3
    $region8: #{tpu_custom_call.1} parent=1 // loop_exit
      _
    %716 = vsyncpa [#allocation3], 1
    %s717 = scalar_lea.sflag [#allocation3], 1
    %718 = vsyncpa %s717, 1
    %719 = vsyncpa [#allocation4], 1
    %s720 = scalar_lea.sflag [#allocation4], 1
    %721 = vsyncpa %s720, 1

</llo_original>
